<compile_context>
chip_gen: v7x
topology: tpu7x:2x2x1
jax: 0.10.0
libtpu: 0.0.40
codegen_flags: <defaults>
</compile_context>

<pallas_src>
import functools

import jax
import jax.numpy as jnp
from jax.experimental import pallas as pl
from jax.experimental.pallas import tpu as pltpu


def _round_up(a, b):
    return (a + b - 1) // b * b


def _fr_stats_kernel(feat_ref, wc_ref, stats_ref, *, nb):
    """Partial BatchNorm statistics of y = w_comb @ relu(feat) for one tile.

    feat_ref:  (nb, F_pad, TL)   streamed feature tile (nb images, TL spatial lanes)
    wc_ref:    (C_pad, F_pad)    resident block-diagonal combined 1x1-conv weights
    stats_ref: (1, C_pad, 2)     per-tile [sum, sum_of_squares] output
    """
    wc = wc_ref[...]
    c_pad = wc_ref.shape[0]
    s = jnp.zeros((c_pad, 1), jnp.float32)
    q = jnp.zeros((c_pad, 1), jnp.float32)
    for b in range(nb):                                    # nb: small compile-time constant
        f = jnp.maximum(feat_ref[b], 0.0)                  # ReLU commutes with the gather
        y = jnp.dot(wc, f, preferred_element_type=jnp.float32)   # (C_pad, TL) on the MXU
        s = s + jnp.sum(y, axis=1, keepdims=True)          # cross-lane reduce -> XLU slot
        q = q + jnp.sum(y * y, axis=1, keepdims=True)
    stats_ref[0] = jnp.concatenate([s, q], axis=1)


def _fr_norm_kernel(feat_ref, wc_ref, scale_ref, shift_ref, out_ref, *, nb):
    """Recompute y = w_comb @ relu(feat) and apply the pre-folded BatchNorm affine."""
    wc = wc_ref[...]
    scale = scale_ref[...]                                 # (C_pad, 1), broadcast along lanes
    shift = shift_ref[...]
    for b in range(nb):
        f = jnp.maximum(feat_ref[b], 0.0)
        y = jnp.dot(wc, f, preferred_element_type=jnp.float32)
        out_ref[b] = (y * scale + shift).astype(out_ref.dtype)


def _pick_tiles(N, Mo, F_pad, C_pad, itemsize, *, max_lane_tile, vmem_budget_bytes):
    """Pick lane tile TL, padded spatial extent, and images-per-step nb under a VMEM budget."""
    def tile_bytes(nb, tl):
        # double-buffered streamed feat + out tiles, plus resident weights / scale / shift
        return (2 * nb * tl * (F_pad * itemsize + C_pad * 4)
                + C_pad * (F_pad * itemsize + 8))

    if Mo <= max_lane_tile and tile_bytes(1, Mo) <= vmem_budget_bytes:
        tl, mo_pad = Mo, Mo                    # full lane axis per image -> no spatial pad
    else:
        tl = (max_lane_tile // 128) * 128      # keep lane tiles 128-dense when tiling
        while tl > 128 and tile_bytes(1, tl) > vmem_budget_bytes:
            tl -= 128
        mo_pad = _round_up(Mo, tl)

    nb = 1                                     # block images to keep per-step lanes >= ~2048
    for d in range(1, N + 1):
        if N % d == 0 and d * tl <= 2048 and tile_bytes(d, tl) <= vmem_budget_bytes:
            nb = d
    return nb, tl, mo_pad


def factorized_reduce(x, w1, w2, gamma, beta, *, eps=1e-5,
                      max_lane_tile=2048, vmem_budget_bytes=12 << 20):
    """x: (N, C_in, H, W) NCHW.  w1/w2: (C_out//2, C_in) squeezed 1x1-conv weights.
    gamma/beta: (C_out,).  Returns (N, C_out, H//2, W//2) NCHW."""
    N, C_in, H, W = x.shape
    C_half = w1.shape[0]
    C_out = 2 * C_half
    assert H % 2 == 0 and W % 2 == 0, "FactorizedReduce assumes even spatial dims"
    Ho, Wo = H // 2, W // 2
    Mo = Ho * Wo
    F = 2 * C_in
    F_pad = _round_up(F, 8)            # sublane axis of the feature tile
    C_pad = _round_up(C_out, 8)        # sublane axis of the output tile (8, not 128)
    itemsize = jnp.dtype(x.dtype).itemsize

    nb, TL, Mo_pad = _pick_tiles(N, Mo, F_pad, C_pad, itemsize,
                                 max_lane_tile=max_lane_tile,
                                 vmem_budget_bytes=vmem_budget_bytes)
    n_b, n_m = N // nb, Mo_pad // TL

    # --- wrapper glue: even/odd strided gather, transpose-free (N, F, Ho*Wo) layout ---
    x_e = x[:, :, 0::2, 0::2].reshape(N, C_in, Mo)       # feeds conv_1
    x_o = x[:, :, 1::2, 1::2].reshape(N, C_in, Mo)       # feeds conv_2 (input shifted 1 in H,W)
    feat = jnp.concatenate([x_e, x_o], axis=1)           # (N, F, Mo), stays in x.dtype
    if F_pad != F or Mo_pad != Mo:
        # zero rows/cols are exactly BN-sum neutral; fused into the concat producer under jit
        feat = jnp.pad(feat, ((0, 0), (0, F_pad - F), (0, Mo_pad - Mo)))

    # Block-diagonal combined weight: top-left block = conv_1, bottom-right block = conv_2.
    wc = jnp.zeros((C_pad, F_pad), jnp.float32)
    wc = wc.at[:C_half, :C_in].set(w1.astype(jnp.float32))
    wc = wc.at[C_half:C_out, C_in:F].set(w2.astype(jnp.float32))
    wc = wc.astype(x.dtype)                               # MXU operand dtype matches feat

    # ---------- call 1: per-tile partial BN statistics (fully parallel -> megacore on v7x) ---
    stats_kernel = functools.partial(_fr_stats_kernel, nb=nb)
    partial_stats = pl.pallas_call(
        stats_kernel,
        out_shape=jax.ShapeDtypeStruct((n_b * n_m, C_pad, 2), jnp.float32),
        grid_spec=pltpu.PrefetchScalarGridSpec(
            num_scalar_prefetch=0,
            grid=(n_b, n_m),
            in_specs=[
                # Streamed feature tiles. If a profile still shows exposed DMA after the big
                # tiles, add pipeline_mode=pl.Buffered(3) here (feat only, not the output).
                pl.BlockSpec((nb, F_pad, TL), lambda i, j: (i, 0, j)),
                pl.BlockSpec((C_pad, F_pad), lambda i, j: (0, 0)),    # resident weights
            ],
            out_specs=pl.BlockSpec((1, C_pad, 2), lambda i, j: (i * n_m + j, 0, 0)),
        ),
        compiler_params=pltpu.CompilerParams(
            dimension_semantics=("parallel", "parallel")),
        cost_estimate=pl.CostEstimate(
            flops=2 * C_pad * F_pad * N * Mo_pad,
            transcendentals=0,
            bytes_accessed=(N * F_pad * Mo_pad * itemsize + C_pad * F_pad * itemsize
                            + n_b * n_m * C_pad * 2 * 4)),
    )(feat, wc)

    # ---------- wrapper: reduce partials, fold BN into one scale/shift per channel ----------
    # TODO(synk): single-pass E[y^2]-E[y]^2 in f32 can lose precision when |mean| >> std at
    #             very large N*Ho*Wo; a Welford/centered partial-sum combine would be sturdier.
    sums = jnp.sum(partial_stats, axis=0)                 # (C_pad, 2)
    total = jnp.float32(N * Mo)                           # padding contributed exactly zero
    mean = sums[:, 0] / total
    var = sums[:, 1] / total - mean * mean                # biased variance (training mode)
    gamma_p = jnp.zeros((C_pad,), jnp.float32).at[:C_out].set(gamma.astype(jnp.float32))
    beta_p = jnp.zeros((C_pad,), jnp.float32).at[:C_out].set(beta.astype(jnp.float32))
    scale = gamma_p * jax.lax.rsqrt(var + eps)
    shift = beta_p - mean * scale
    scale2 = scale.reshape(C_pad, 1)
    shift2 = shift.reshape(C_pad, 1)

    # ---------- call 2: normalize + affine, lane-dense stores, fully parallel ----------------
    norm_kernel = functools.partial(_fr_norm_kernel, nb=nb)
    out_flat = pl.pallas_call(
        norm_kernel,
        out_shape=jax.ShapeDtypeStruct((N, C_pad, Mo_pad), x.dtype),
        grid_spec=pltpu.PrefetchScalarGridSpec(
            num_scalar_prefetch=0,
            grid=(n_b, n_m),
            in_specs=[
                pl.BlockSpec((nb, F_pad, TL), lambda i, j: (i, 0, j)),
                pl.BlockSpec((C_pad, F_pad), lambda i, j: (0, 0)),    # resident weights
                pl.BlockSpec((C_pad, 1), lambda i, j: (0, 0)),        # resident scale
                pl.BlockSpec((C_pad, 1), lambda i, j: (0, 0)),        # resident shift
            ],
            out_specs=pl.BlockSpec((nb, C_pad, TL), lambda i, j: (i, 0, j)),
        ),
        compiler_params=pltpu.CompilerParams(
            dimension_semantics=("parallel", "parallel")),
        cost_estimate=pl.CostEstimate(
            flops=2 * C_pad * F_pad * N * Mo_pad + 2 * C_pad * N * Mo_pad,
            transcendentals=0,
            bytes_accessed=(N * (F_pad + C_pad) * Mo_pad * itemsize
                            + C_pad * F_pad * itemsize)),
    )(feat, wc, scale2, shift2)

    # --- wrapper glue: drop padding, un-flatten spatial (no transpose needed) ---
    return out_flat[:, :C_out, :Mo].reshape(N, C_out, Ho, Wo)


def factorized_reduce_ref(x, w1, w2, gamma, beta, *, eps=1e-5):
    """Pure-JAX reference mirroring the PyTorch module in training mode."""
    r = jnp.maximum(x, 0.0)
    y1 = jax.lax.conv_general_dilated(
        r, w1[:, :, None, None], (2, 2), "VALID",
        dimension_numbers=("NCHW", "OIHW", "NCHW"))
    y2 = jax.lax.conv_general_dilated(
        r[:, :, 1:, 1:], w2[:, :, None, None], (2, 2), "VALID",
        dimension_numbers=("NCHW", "OIHW", "NCHW"))
    y = jnp.concatenate([y1, y2], axis=1)
    mean = jnp.mean(y, axis=(0, 2, 3), keepdims=True)
    var = jnp.mean((y - mean) ** 2, axis=(0, 2, 3), keepdims=True)
    y = (y - mean) / jnp.sqrt(var + eps)
    return y * gamma[None, :, None, None] + beta[None, :, None, None]


if __name__ == "__main__":
    # Small deterministic example consistent with the module: C_out even, stride-2 reduce.
    N, C_in, C_out, H, W = 2, 4, 8, 16, 16
    C_half = C_out // 2

    key = jax.random.PRNGKey(0)
    k_x, k_w1, k_w2, k_g, k_b = jax.random.split(key, 5)
    x = jax.random.normal(k_x, (N, C_in, H, W), dtype=jnp.float32)
    w1 = 0.1 * jax.random.normal(k_w1, (C_half, C_in), dtype=jnp.float32)   # conv_1 (Co/2,Ci,1,1)
    w2 = 0.1 * jax.random.normal(k_w2, (C_half, C_in), dtype=jnp.float32)   # conv_2 (Co/2,Ci,1,1)
    gamma = 1.0 + 0.1 * jax.random.normal(k_g, (C_out,), dtype=jnp.float32)
    beta = 0.1 * jax.random.normal(k_b, (C_out,), dtype=jnp.float32)

    fr = jax.jit(factorized_reduce)    # fuses the gather / pad wrapper glue around the kernels
    out = jax.block_until_ready(fr(x, w1, w2, gamma, beta))

    ref = factorized_reduce_ref(x, w1, w2, gamma, beta)
    assert out.shape == (N, C_out, H // 2, W // 2), out.shape
    assert jnp.allclose(out, ref, atol=1e-3, rtol=1e-3), float(jnp.max(jnp.abs(out - ref)))

    print("KERNEL_OK")
</pallas_src>

<mosaic_0001>
module attributes {stable_mosaic.version = 11 : i64} {
  func.func @_fr_stats_kernel(%arg0: i32, %arg1: i32, %arg2: memref<2x8x64xf32, #tpu.memory_space<vmem>>, %arg3: memref<8x8xf32, #tpu.memory_space<vmem>>, %arg4: memref<1x8x2xf32, #tpu.memory_space<vmem>>) attributes {dimension_semantics = [#tpu.dimension_semantics<parallel>, #tpu.dimension_semantics<parallel>], iteration_bounds = array<i64: 1, 1>, scalar_prefetch = 0 : i64, scratch_operands = 0 : i64, tpu.core_type = #tpu.core_type<tc>, window_params = [{transform_indices = @transform_0, window_bounds = array<i64: 2, 8, 64>}, {pipeline_mode = #tpu.pipeline_mode<synchronous>, transform_indices = @transform_1, window_bounds = array<i64: 8, 8>}, {transform_indices = @transform_2, window_bounds = array<i64: 1, 8, 2>}]} {
    %c0 = arith.constant 0 : index
    %c0_0 = arith.constant 0 : index
    %0 = vector.load %arg3[%c0, %c0_0] : memref<8x8xf32, #tpu.memory_space<vmem>>, vector<8x8xf32>
    %cst = arith.constant 0.000000e+00 : f32
    %1 = vector.broadcast %cst : f32 to vector<8x1xf32>
    %cst_1 = arith.constant 0.000000e+00 : f32
    %2 = vector.broadcast %cst_1 : f32 to vector<8x1xf32>
    %c0_2 = arith.constant 0 : index
    %c0_3 = arith.constant 0 : index
    %c0_4 = arith.constant 0 : index
    %3 = vector.load %arg2[%c0_2, %c0_3, %c0_4] : memref<2x8x64xf32, #tpu.memory_space<vmem>>, vector<1x8x64xf32>
    %4 = vector.shape_cast %3 : vector<1x8x64xf32> to vector<8x64xf32>
    %cst_5 = arith.constant 0.000000e+00 : f32
    %5 = vector.broadcast %cst_5 : f32 to vector<8x64xf32>
    %6 = arith.maximumf %4, %5 : vector<8x64xf32>
    %cst_6 = arith.constant dense<0.000000e+00> : vector<8x64xf32>
    %7 = tpu.matmul %0, %6, %cst_6 {dimension_numbers = #tpu.dot_dimension_numbers<[1], [0], [0], [1], [0, 0, 1, 1], [], []>} : vector<8x8xf32>, vector<8x64xf32>, vector<8x64xf32> -> vector<8x64xf32>
    %cst_7 = arith.constant dense<0.000000e+00> : vector<8xf32>
    %8 = vector.multi_reduction <add>, %7, %cst_7 [1] : vector<8x64xf32> to vector<8xf32>
    %9 = vector.shape_cast %8 : vector<8xf32> to vector<8x1xf32>
    %10 = arith.addf %1, %9 : vector<8x1xf32>
    %11 = arith.mulf %7, %7 : vector<8x64xf32>
    %cst_8 = arith.constant dense<0.000000e+00> : vector<8xf32>
    %12 = vector.multi_reduction <add>, %11, %cst_8 [1] : vector<8x64xf32> to vector<8xf32>
    %13 = vector.shape_cast %12 : vector<8xf32> to vector<8x1xf32>
    %14 = arith.addf %2, %13 : vector<8x1xf32>
    %c1 = arith.constant 1 : index
    %c0_9 = arith.constant 0 : index
    %c0_10 = arith.constant 0 : index
    %15 = vector.load %arg2[%c1, %c0_9, %c0_10] : memref<2x8x64xf32, #tpu.memory_space<vmem>>, vector<1x8x64xf32>
    %16 = vector.shape_cast %15 : vector<1x8x64xf32> to vector<8x64xf32>
    %cst_11 = arith.constant 0.000000e+00 : f32
    %17 = vector.broadcast %cst_11 : f32 to vector<8x64xf32>
    %18 = arith.maximumf %16, %17 : vector<8x64xf32>
    %cst_12 = arith.constant dense<0.000000e+00> : vector<8x64xf32>
    %19 = tpu.matmul %0, %18, %cst_12 {dimension_numbers = #tpu.dot_dimension_numbers<[1], [0], [0], [1], [0, 0, 1, 1], [], []>} : vector<8x8xf32>, vector<8x64xf32>, vector<8x64xf32> -> vector<8x64xf32>
    %cst_13 = arith.constant dense<0.000000e+00> : vector<8xf32>
    %20 = vector.multi_reduction <add>, %19, %cst_13 [1] : vector<8x64xf32> to vector<8xf32>
    %21 = vector.shape_cast %20 : vector<8xf32> to vector<8x1xf32>
    %22 = arith.addf %10, %21 : vector<8x1xf32>
    %23 = arith.mulf %19, %19 : vector<8x64xf32>
    %cst_14 = arith.constant dense<0.000000e+00> : vector<8xf32>
    %24 = vector.multi_reduction <add>, %23, %cst_14 [1] : vector<8x64xf32> to vector<8xf32>
    %25 = vector.shape_cast %24 : vector<8xf32> to vector<8x1xf32>
    %26 = arith.addf %14, %25 : vector<8x1xf32>
    %27 = tpu.concatenate %22, %26 in 1 : vector<8x1xf32>, vector<8x1xf32> -> vector<8x2xf32>
    %c0_15 = arith.constant 0 : index
    %c0_16 = arith.constant 0 : index
    %c0_17 = arith.constant 0 : index
    %28 = vector.load %arg4[%c0_15, %c0_16, %c0_17] : memref<1x8x2xf32, #tpu.memory_space<vmem>>, vector<1x8x2xf32>
    %29 = vector.shape_cast %28 : vector<1x8x2xf32> to vector<8x2xf32>
    %30 = vector.shape_cast %27 : vector<8x2xf32> to vector<1x8x2xf32>
    tpu.vector_store %arg4[%c0_15, %c0_16, %c0_17], %30 {strides = array<i32>} : memref<1x8x2xf32, #tpu.memory_space<vmem>>, vector<1x8x2xf32>,
    return
  }
  func.func @transform_0(%arg0: i32, %arg1: i32) -> (i32, i32, i32) {
    %c0_i32 = arith.constant 0 : i32
    %c0_i32_0 = arith.constant 0 : i32
    return %arg0, %c0_i32, %arg1 : i32, i32, i32
  }
  func.func @transform_1(%arg0: i32, %arg1: i32) -> (i32, i32) {
    %c0_i32 = arith.constant 0 : i32
    %c0_i32_0 = arith.constant 0 : i32
    %c0_i32_1 = arith.constant 0 : i32
    return %c0_i32, %c0_i32_0 : i32, i32
  }
  func.func @transform_2(%arg0: i32, %arg1: i32) -> (i32, i32, i32) {
    %c1_i32 = arith.constant 1 : i32
    %0 = arith.muli %arg0, %c1_i32 : i32
    %1 = arith.addi %0, %arg1 : i32
    %c0_i32 = arith.constant 0 : i32
    %c0_i32_0 = arith.constant 0 : i32
    %c0_i32_1 = arith.constant 0 : i32
    return %1, %c0_i32, %c0_i32_0 : i32, i32, i32
  }
}

module attributes {stable_mosaic.version = 11 : i64} {
  func.func @_fr_norm_kernel(%arg0: i32, %arg1: i32, %arg2: memref<2x8x64xf32, #tpu.memory_space<vmem>>, %arg3: memref<8x8xf32, #tpu.memory_space<vmem>>, %arg4: memref<8x1xf32, #tpu.memory_space<vmem>>, %arg5: memref<8x1xf32, #tpu.memory_space<vmem>>, %arg6: memref<2x8x64xf32, #tpu.memory_space<vmem>>) attributes {dimension_semantics = [#tpu.dimension_semantics<parallel>, #tpu.dimension_semantics<parallel>], iteration_bounds = array<i64: 1, 1>, scalar_prefetch = 0 : i64, scratch_operands = 0 : i64, tpu.core_type = #tpu.core_type<tc>, window_params = [{transform_indices = @transform_0, window_bounds = array<i64: 2, 8, 64>}, {pipeline_mode = #tpu.pipeline_mode<synchronous>, transform_indices = @transform_1, window_bounds = array<i64: 8, 8>}, {pipeline_mode = #tpu.pipeline_mode<synchronous>, transform_indices = @transform_2, window_bounds = array<i64: 8, 1>}, {pipeline_mode = #tpu.pipeline_mode<synchronous>, transform_indices = @transform_3, window_bounds = array<i64: 8, 1>}, {transform_indices = @transform_4, window_bounds = array<i64: 2, 8, 64>}]} {
    %c0 = arith.constant 0 : index
    %c0_0 = arith.constant 0 : index
    %0 = vector.load %arg3[%c0, %c0_0] : memref<8x8xf32, #tpu.memory_space<vmem>>, vector<8x8xf32>
    %c0_1 = arith.constant 0 : index
    %c0_2 = arith.constant 0 : index
    %1 = vector.load %arg4[%c0_1, %c0_2] : memref<8x1xf32, #tpu.memory_space<vmem>>, vector<8x1xf32>
    %c0_3 = arith.constant 0 : index
    %c0_4 = arith.constant 0 : index
    %2 = vector.load %arg5[%c0_3, %c0_4] : memref<8x1xf32, #tpu.memory_space<vmem>>, vector<8x1xf32>
    %c0_5 = arith.constant 0 : index
    %c0_6 = arith.constant 0 : index
    %c0_7 = arith.constant 0 : index
    %3 = vector.load %arg2[%c0_5, %c0_6, %c0_7] : memref<2x8x64xf32, #tpu.memory_space<vmem>>, vector<1x8x64xf32>
    %4 = vector.shape_cast %3 : vector<1x8x64xf32> to vector<8x64xf32>
    %cst = arith.constant 0.000000e+00 : f32
    %5 = vector.broadcast %cst : f32 to vector<8x64xf32>
    %6 = arith.maximumf %4, %5 : vector<8x64xf32>
    %cst_8 = arith.constant dense<0.000000e+00> : vector<8x64xf32>
    %7 = tpu.matmul %0, %6, %cst_8 {dimension_numbers = #tpu.dot_dimension_numbers<[1], [0], [0], [1], [0, 0, 1, 1], [], []>} : vector<8x8xf32>, vector<8x64xf32>, vector<8x64xf32> -> vector<8x64xf32>
    %8 = vector.broadcast %1 : vector<8x1xf32> to vector<8x64xf32>
    %9 = arith.mulf %7, %8 : vector<8x64xf32>
    %10 = vector.broadcast %2 : vector<8x1xf32> to vector<8x64xf32>
    %11 = arith.addf %9, %10 : vector<8x64xf32>
    %c0_9 = arith.constant 0 : index
    %c0_10 = arith.constant 0 : index
    %c0_11 = arith.constant 0 : index
    %12 = vector.load %arg6[%c0_9, %c0_10, %c0_11] : memref<2x8x64xf32, #tpu.memory_space<vmem>>, vector<1x8x64xf32>
    %13 = vector.shape_cast %12 : vector<1x8x64xf32> to vector<8x64xf32>
    %14 = vector.shape_cast %11 : vector<8x64xf32> to vector<1x8x64xf32>
    tpu.vector_store %arg6[%c0_9, %c0_10, %c0_11], %14 {strides = array<i32>} : memref<2x8x64xf32, #tpu.memory_space<vmem>>, vector<1x8x64xf32>,
    %c1 = arith.constant 1 : index
    %c0_12 = arith.constant 0 : index
    %c0_13 = arith.constant 0 : index
    %15 = vector.load %arg2[%c1, %c0_12, %c0_13] : memref<2x8x64xf32, #tpu.memory_space<vmem>>, vector<1x8x64xf32>
    %16 = vector.shape_cast %15 : vector<1x8x64xf32> to vector<8x64xf32>
    %cst_14 = arith.constant 0.000000e+00 : f32
    %17 = vector.broadcast %cst_14 : f32 to vector<8x64xf32>
    %18 = arith.maximumf %16, %17 : vector<8x64xf32>
    %cst_15 = arith.constant dense<0.000000e+00> : vector<8x64xf32>
    %19 = tpu.matmul %0, %18, %cst_15 {dimension_numbers = #tpu.dot_dimension_numbers<[1], [0], [0], [1], [0, 0, 1, 1], [], []>} : vector<8x8xf32>, vector<8x64xf32>, vector<8x64xf32> -> vector<8x64xf32>
    %20 = vector.broadcast %1 : vector<8x1xf32> to vector<8x64xf32>
    %21 = arith.mulf %19, %20 : vector<8x64xf32>
    %22 = vector.broadcast %2 : vector<8x1xf32> to vector<8x64xf32>
    %23 = arith.addf %21, %22 : vector<8x64xf32>
    %c1_16 = arith.constant 1 : index
    %c0_17 = arith.constant 0 : index
    %c0_18 = arith.constant 0 : index
    %24 = vector.load %arg6[%c1_16, %c0_17, %c0_18] : memref<2x8x64xf32, #tpu.memory_space<vmem>>, vector<1x8x64xf32>
    %25 = vector.shape_cast %24 : vector<1x8x64xf32> to vector<8x64xf32>
    %26 = vector.shape_cast %23 : vector<8x64xf32> to vector<1x8x64xf32>
    tpu.vector_store %arg6[%c1_16, %c0_17, %c0_18], %26 {strides = array<i32>} : memref<2x8x64xf32, #tpu.memory_space<vmem>>, vector<1x8x64xf32>,
    return
  }
  func.func @transform_0(%arg0: i32, %arg1: i32) -> (i32, i32, i32) {
    %c0_i32 = arith.constant 0 : i32
    %c0_i32_0 = arith.constant 0 : i32
    return %arg0, %c0_i32, %arg1 : i32, i32, i32
  }
  func.func @transform_1(%arg0: i32, %arg1: i32) -> (i32, i32) {
    %c0_i32 = arith.constant 0 : i32
    %c0_i32_0 = arith.constant 0 : i32
    %c0_i32_1 = arith.constant 0 : i32
    return %c0_i32, %c0_i32_0 : i32, i32
  }
  func.func @transform_2(%arg0: i32, %arg1: i32) -> (i32, i32) {
    %c0_i32 = arith.constant 0 : i32
    %c0_i32_0 = arith.constant 0 : i32
    %c0_i32_1 = arith.constant 0 : i32
    return %c0_i32, %c0_i32_0 : i32, i32
  }
  func.func @transform_3(%arg0: i32, %arg1: i32) -> (i32, i32) {
    %c0_i32 = arith.constant 0 : i32
    %c0_i32_0 = arith.constant 0 : i32
    %c0_i32_1 = arith.constant 0 : i32
    return %c0_i32, %c0_i32_0 : i32, i32
  }
  func.func @transform_4(%arg0: i32, %arg1: i32) -> (i32, i32, i32) {
    %c0_i32 = arith.constant 0 : i32
    %c0_i32_0 = arith.constant 0 : i32
    return %arg0, %c0_i32, %arg1 : i32, i32, i32
  }
}

</mosaic_0001>

<llo_original>
// kernel: factorized_reduce.2
$region0: #{factorized_reduce.2}
  #allocation0 [shape = 'u32[]', space=smem, size = 0x4, offset = 0x4, fixed_abs, tag = 'smem constant byte address 0x4 - core index']
  #allocation1 [shape = 'u32[144,128]{1,0:T(1,128)}', space=vmem, size = 0x12000, scoped, tag = 'internal scratch']
  %s0 = inlined_call_operand.vmem [shape: f32[2,8,64], index: 0, kind: input, shape index: {}]
  %s1 = inlined_call_operand.vmem [shape: f32[8,8], index: 1, kind: input, shape index: {}]
  %s2 = inlined_call_operand.vmem [shape: f32[1,8,2], index: 2, kind: output, shape index: {}]
  %s3 = sld [smem:[#allocation0]]
  $region18: #{factorized_reduce.2} parent=0
    _
  %s5 = ssub.s32 1, %s3
  %s6 = scalar_select 0, %s5, %s3
  // Predicated region
  $region2: #{factorized_reduce.2} parent=0 // pred_check
    _
  $region3: #{factorized_reduce.2} parent=0 // pred_check_branch
    %8 = sbr.rel (0) target = $region5
  $region4: #{factorized_reduce.2} parent=0 // pred_region
    _
  $region5: #{factorized_reduce.2} parent=0 // pred_fallthru
    _
  // Predicated region
  $region6: #{factorized_reduce.2} parent=0 // pred_check
    _
  $region7: #{factorized_reduce.2} parent=0 // pred_check_branch
    %10 = sbr.rel (0) target = $region9
  $region8: #{factorized_reduce.2} parent=0 // pred_region
    _
  $region9: #{factorized_reduce.2} parent=0 // pred_fallthru
    _
  %s11 = sadd.s32 0, 0
  %p12 = scmp.lt.s32.totalorder %s11, 0
  %s13 = scalar_select %p12, %s11, 0
  %s14 = smul.addr %s13, 8
  %s15 = scalar_lea.vmem %s2, %s14
  %s16 = sadd.s32 0, 0
  %p17 = scmp.lt.s32.totalorder %s16, 0
  %s18 = scalar_select %p17, %s16, 0
  %s19 = smul.addr %s18, 8
  %s20 = scalar_lea.vmem %s2, %s19
  %s21 = sadd.s32 0, 0
  %v22 = vld [vmem:[%s1] sm:$0xff]
  %v23 = vld [vmem:[%s0] sm:$0xff]
  %v24 = vmax.f32 %v23, 0.0
  %vm25 = vcmask 64512
  %v27 = vsel %vm25, %v22, 0
  %29 = vmatprep.subr.mxu0 0.0
  %30 = vmatpush1.msra.mxu0 %v24
  %31 = vmatprep.subr.mxu0 0.0
  %32 = vmatpush1.msra.mxu0 0.0
  %33 = vmatprep.subr.mxu0 0.0
  %34 = vmatpush1.msra.mxu0 0.0
  %35 = vmatprep.subr.mxu0 0.0
  %36 = vmatpush1.msra.mxu0 0.0
  %37 = vmatprep.subr.mxu0 0.0
  %38 = vmatpush1.msra.mxu0 0.0
  %39 = vmatprep.subr.mxu0 0.0
  %40 = vmatpush1.msra.mxu0 0.0
  %41 = vmatprep.subr.mxu0 0.0
  %42 = vmatpush1.msra.mxu0 0.0
  %43 = vmatprep.subr.mxu0 0.0
  %44 = vmatpush1.msra.mxu0 0.0
  %45 = vmatprep.subr.mxu0 0.0
  %46 = vmatpush1.msra.mxu0 0.0
  %47 = vmatprep.subr.mxu0 0.0
  %48 = vmatpush1.msra.mxu0 0.0
  %49 = vmatprep.subr.mxu0 0.0
  %50 = vmatpush1.msra.mxu0 0.0
  %51 = vmatprep.subr.mxu0 0.0
  %52 = vmatpush1.msra.mxu0 0.0
  %53 = vmatprep.subr.mxu0 0.0
  %54 = vmatpush1.msra.mxu0 0.0
  %55 = vmatprep.subr.mxu0 0.0
  %56 = vmatpush1.msra.mxu0 0.0
  %57 = vmatprep.subr.mxu0 0.0
  %58 = vmatpush1.msra.mxu0 0.0
  %59 = vmatprep.subr.mxu0 0.0
  %60 = vmatpush1.msra.mxu0 0.0
  %61 = vmatprep.subr.mxu0 0.0
  %62 = vmatpush1.msra.mxu0 0.0
  %63 = vmatprep.subr.mxu0 0.0
  %64 = vmatpush1.msra.mxu0 0.0
  %65 = vmatprep.subr.mxu0 0.0
  %66 = vmatpush1.msra.mxu0 0.0
  %67 = vmatprep.subr.mxu0 0.0
  %68 = vmatpush1.msra.mxu0 0.0
  %69 = vmatprep.subr.mxu0 0.0
  %70 = vmatpush1.msra.mxu0 0.0
  %71 = vmatprep.subr.mxu0 0.0
  %72 = vmatpush1.msra.mxu0 0.0
  %73 = vmatprep.subr.mxu0 0.0
  %74 = vmatpush1.msra.mxu0 0.0
  %75 = vmatprep.subr.mxu0 0.0
  %76 = vmatpush1.msra.mxu0 0.0
  %77 = vmatprep.subr.mxu0 0.0
  %78 = vmatpush1.msra.mxu0 0.0
  %79 = vmatprep.subr.mxu0 0.0
  %80 = vmatpush1.msra.mxu0 0.0
  %81 = vmatprep.subr.mxu0 0.0
  %82 = vmatpush1.msra.mxu0 0.0
  %83 = vmatprep.subr.mxu0 0.0
  %84 = vmatpush1.msra.mxu0 0.0
  %85 = vmatprep.subr.mxu0 0.0
  %86 = vmatpush1.msra.mxu0 0.0
  %87 = vmatprep.subr.mxu0 0.0
  %88 = vmatpush1.msra.mxu0 0.0
  %89 = vmatprep.subr.mxu0 0.0
  %90 = vmatpush1.msra.mxu0 0.0
  %91 = vmatprep.subr.mxu0 0.0
  %92 = vmatpush1.msra.mxu0 0.0
  %93 = vmatprep.mubr.f32.mxu0 0.0
  %94 = vmatmul.mubr.f32.gmra.mrb[0].mxu0 %v27
  %v95 = vpop.f32.mrb[0].mxu0
  %v96 = vadd.f32 0.0, %v95
  %v97 = vpop.f32.mrb[0].mxu0
  %98 = vdwg.mxu0
  %vm99 = vcmask 523264
  %v100 = vsel %vm99, %v96, 0.0
  %101 = vadd.xlane.f32.xlu0 %v100
  %v102 = vpop.xlane.xlu0 %101
  %v103 = vadd.f32 %v102, 0.0
  %v104 = vmul.f32 %v96, %v96
  %v105 = vsel %vm99, %v104, 0.0
  %106 = vadd.xlane.f32.xlu0 %v105
  %v107 = vpop.xlane.xlu0 %106
  %v108 = vadd.f32 %v107, 0.0
  %s109 = scalar_lea.vmem %s0, 8
  %v110 = vld [vmem:[%s109] sm:$0xff]
  %v111 = vmax.f32 %v110, 0.0
  %112 = vmatprep.subr.mxu0 0.0
  %113 = vmatpush1.msra.mxu0 %v111
  %114 = vmatprep.subr.mxu0 0.0
  %115 = vmatpush1.msra.mxu0 0.0
  %116 = vmatprep.subr.mxu0 0.0
  %117 = vmatpush1.msra.mxu0 0.0
  %118 = vmatprep.subr.mxu0 0.0
  %119 = vmatpush1.msra.mxu0 0.0
  %120 = vmatprep.subr.mxu0 0.0
  %121 = vmatpush1.msra.mxu0 0.0
  %122 = vmatprep.subr.mxu0 0.0
  %123 = vmatpush1.msra.mxu0 0.0
  %124 = vmatprep.subr.mxu0 0.0
  %125 = vmatpush1.msra.mxu0 0.0
  %126 = vmatprep.subr.mxu0 0.0
  %127 = vmatpush1.msra.mxu0 0.0
  %128 = vmatprep.subr.mxu0 0.0
  %129 = vmatpush1.msra.mxu0 0.0
  %130 = vmatprep.subr.mxu0 0.0
  %131 = vmatpush1.msra.mxu0 0.0
  %132 = vmatprep.subr.mxu0 0.0
  %133 = vmatpush1.msra.mxu0 0.0
  %134 = vmatprep.subr.mxu0 0.0
  %135 = vmatpush1.msra.mxu0 0.0
  %136 = vmatprep.subr.mxu0 0.0
  %137 = vmatpush1.msra.mxu0 0.0
  %138 = vmatprep.subr.mxu0 0.0
  %139 = vmatpush1.msra.mxu0 0.0
  %140 = vmatprep.subr.mxu0 0.0
  %141 = vmatpush1.msra.mxu0 0.0
  %142 = vmatprep.subr.mxu0 0.0
  %143 = vmatpush1.msra.mxu0 0.0
  %144 = vmatprep.subr.mxu0 0.0
  %145 = vmatpush1.msra.mxu0 0.0
  %146 = vmatprep.subr.mxu0 0.0
  %147 = vmatpush1.msra.mxu0 0.0
  %148 = vmatprep.subr.mxu0 0.0
  %149 = vmatpush1.msra.mxu0 0.0
  %150 = vmatprep.subr.mxu0 0.0
  %151 = vmatpush1.msra.mxu0 0.0
  %152 = vmatprep.subr.mxu0 0.0
  %153 = vmatpush1.msra.mxu0 0.0
  %154 = vmatprep.subr.mxu0 0.0
  %155 = vmatpush1.msra.mxu0 0.0
  %156 = vmatprep.subr.mxu0 0.0
  %157 = vmatpush1.msra.mxu0 0.0
  %158 = vmatprep.subr.mxu0 0.0
  %159 = vmatpush1.msra.mxu0 0.0
  %160 = vmatprep.subr.mxu0 0.0
  %161 = vmatpush1.msra.mxu0 0.0
  %162 = vmatprep.subr.mxu0 0.0
  %163 = vmatpush1.msra.mxu0 0.0
  %164 = vmatprep.subr.mxu0 0.0
  %165 = vmatpush1.msra.mxu0 0.0
  %166 = vmatprep.subr.mxu0 0.0
  %167 = vmatpush1.msra.mxu0 0.0
  %168 = vmatprep.subr.mxu0 0.0
  %169 = vmatpush1.msra.mxu0 0.0
  %170 = vmatprep.subr.mxu0 0.0
  %171 = vmatpush1.msra.mxu0 0.0
  %172 = vmatprep.subr.mxu0 0.0
  %173 = vmatpush1.msra.mxu0 0.0
  %174 = vmatprep.subr.mxu0 0.0
  %175 = vmatpush1.msra.mxu0 0.0
  %176 = vmatprep.mubr.f32.mxu0 0.0
  %177 = vmatmul.mubr.f32.gmra.mrb[0].mxu0 %v27
  %v178 = vpop.f32.mrb[0].mxu0
  %v179 = vadd.f32 0.0, %v178
  %v180 = vpop.f32.mrb[0].mxu0
  %181 = vdwg.mxu0
  %v182 = vsel %vm99, %v179, 0.0
  %183 = vadd.xlane.f32.xlu0 %v182
  %v184 = vpop.xlane.xlu0 %183
  %v185 = vadd.f32 %v103, %v184
  %v186 = vmul.f32 %v179, %v179
  %v187 = vsel %vm99, %v186, 0.0
  %188 = vadd.xlane.f32.xlu0 %v187
  %v189 = vpop.xlane.xlu0 %188
  %v190 = vadd.f32 %v108, %v189
  %vm191 = vcmask 7168
  %v192 = vsel %vm191, %v185, %v190
  %vm193 = vcmask 15360
  %194 = vst.msk [vmem:[%s20] sm:$0xff] %vm193, %v192
  %s195 = sadd.s32 0, 0
  %p196 = scmp.lt.s32.totalorder %s195, 0
  %s197 = scalar_select %p196, %s195, 0
  %s198 = smul.addr %s197, 8
  %s199 = scalar_lea.vmem %s2, %s198
  // Predicated region
  $region10: #{factorized_reduce.2} parent=0 // pred_check
    _
  $region11: #{factorized_reduce.2} parent=0 // pred_check_branch
    %201 = sbr.rel (0) target = $region13
  $region12: #{factorized_reduce.2} parent=0 // pred_region
    %s202 = sadd.s32 0, 0
  $region13: #{factorized_reduce.2} parent=0 // pred_fallthru
    _
  // Predicated region
  $region14: #{factorized_reduce.2} parent=0 // pred_check
    _
  $region15: #{factorized_reduce.2} parent=0 // pred_check_branch
    %204 = sbr.rel (0) target = $region17
  $region16: #{factorized_reduce.2} parent=0 // pred_region
    %s205 = sadd.s32 0, 0
    %p206 = scmp.lt.s32.totalorder %s205, 0
    %s207 = scalar_select %p206, %s205, 0
    %s208 = smul.addr %s207, 8
    %s209 = scalar_lea.vmem %s2, %s208
  $region17: #{factorized_reduce.2} parent=0 // pred_fallthru
    _

// kernel: factorized_reduce.3
$region0: #{factorized_reduce.3}
  #allocation0 [shape = 'u32[]', space=smem, size = 0x4, offset = 0x4, fixed_abs, tag = 'smem constant byte address 0x4 - core index']
  #allocation1 [shape = 'u32[144,128]{1,0:T(1,128)}', space=vmem, size = 0x12000, scoped, tag = 'internal scratch']
  %s0 = inlined_call_operand.vmem [shape: f32[2,8,64], index: 0, kind: input, shape index: {}]
  %s1 = inlined_call_operand.vmem [shape: f32[8,8], index: 1, kind: input, shape index: {}]
  %s2 = inlined_call_operand.vmem [shape: f32[8,1], index: 2, kind: input, shape index: {}]
  %s3 = inlined_call_operand.vmem [shape: f32[8,1], index: 3, kind: input, shape index: {}]
  %s4 = inlined_call_operand.vmem [shape: f32[2,8,64], index: 4, kind: output, shape index: {}]
  %s5 = sld [smem:[#allocation0]]
  $region26: #{factorized_reduce.3} parent=0
    _
  %s7 = ssub.s32 1, %s5
  %s8 = scalar_select 0, %s7, %s5
  // Predicated region
  $region2: #{factorized_reduce.3} parent=0 // pred_check
    _
  $region3: #{factorized_reduce.3} parent=0 // pred_check_branch
    %10 = sbr.rel (0) target = $region5
  $region4: #{factorized_reduce.3} parent=0 // pred_region
    _
  $region5: #{factorized_reduce.3} parent=0 // pred_fallthru
    _
  // Predicated region
  $region6: #{factorized_reduce.3} parent=0 // pred_check
    _
  $region7: #{factorized_reduce.3} parent=0 // pred_check_branch
    %12 = sbr.rel (0) target = $region9
  $region8: #{factorized_reduce.3} parent=0 // pred_region
    _
  $region9: #{factorized_reduce.3} parent=0 // pred_fallthru
    _
  // Predicated region
  $region10: #{factorized_reduce.3} parent=0 // pred_check
    _
  $region11: #{factorized_reduce.3} parent=0 // pred_check_branch
    %14 = sbr.rel (0) target = $region13
  $region12: #{factorized_reduce.3} parent=0 // pred_region
    _
  $region13: #{factorized_reduce.3} parent=0 // pred_fallthru
    _
  // Predicated region
  $region14: #{factorized_reduce.3} parent=0 // pred_check
    _
  $region15: #{factorized_reduce.3} parent=0 // pred_check_branch
    %16 = sbr.rel (0) target = $region17
  $region16: #{factorized_reduce.3} parent=0 // pred_region
    _
  $region17: #{factorized_reduce.3} parent=0 // pred_fallthru
    _
  %v17 = vld [vmem:[%s1] sm:$0xff]
  %v18 = vld [vmem:[%s2] sm:$0xff]
  %v19 = vld [vmem:[%s3] sm:$0xff]
  %v20 = vld [vmem:[%s0] sm:$0xff]
  %v21 = vmax.f32 %v20, 0.0
  %vm22 = vcmask 64512
  %v24 = vsel %vm22, %v17, 0
  %26 = vmatprep.subr.mxu0 0.0
  %27 = vmatpush1.msra.mxu0 %v21
  %28 = vmatprep.subr.mxu0 0.0
  %29 = vmatpush1.msra.mxu0 0.0
  %30 = vmatprep.subr.mxu0 0.0
  %31 = vmatpush1.msra.mxu0 0.0
  %32 = vmatprep.subr.mxu0 0.0
  %33 = vmatpush1.msra.mxu0 0.0
  %34 = vmatprep.subr.mxu0 0.0
  %35 = vmatpush1.msra.mxu0 0.0
  %36 = vmatprep.subr.mxu0 0.0
  %37 = vmatpush1.msra.mxu0 0.0
  %38 = vmatprep.subr.mxu0 0.0
  %39 = vmatpush1.msra.mxu0 0.0
  %40 = vmatprep.subr.mxu0 0.0
  %41 = vmatpush1.msra.mxu0 0.0
  %42 = vmatprep.subr.mxu0 0.0
  %43 = vmatpush1.msra.mxu0 0.0
  %44 = vmatprep.subr.mxu0 0.0
  %45 = vmatpush1.msra.mxu0 0.0
  %46 = vmatprep.subr.mxu0 0.0
  %47 = vmatpush1.msra.mxu0 0.0
  %48 = vmatprep.subr.mxu0 0.0
  %49 = vmatpush1.msra.mxu0 0.0
  %50 = vmatprep.subr.mxu0 0.0
  %51 = vmatpush1.msra.mxu0 0.0
  %52 = vmatprep.subr.mxu0 0.0
  %53 = vmatpush1.msra.mxu0 0.0
  %54 = vmatprep.subr.mxu0 0.0
  %55 = vmatpush1.msra.mxu0 0.0
  %56 = vmatprep.subr.mxu0 0.0
  %57 = vmatpush1.msra.mxu0 0.0
  %58 = vmatprep.subr.mxu0 0.0
  %59 = vmatpush1.msra.mxu0 0.0
  %60 = vmatprep.subr.mxu0 0.0
  %61 = vmatpush1.msra.mxu0 0.0
  %62 = vmatprep.subr.mxu0 0.0
  %63 = vmatpush1.msra.mxu0 0.0
  %64 = vmatprep.subr.mxu0 0.0
  %65 = vmatpush1.msra.mxu0 0.0
  %66 = vmatprep.subr.mxu0 0.0
  %67 = vmatpush1.msra.mxu0 0.0
  %68 = vmatprep.subr.mxu0 0.0
  %69 = vmatpush1.msra.mxu0 0.0
  %70 = vmatprep.subr.mxu0 0.0
  %71 = vmatpush1.msra.mxu0 0.0
  %72 = vmatprep.subr.mxu0 0.0
  %73 = vmatpush1.msra.mxu0 0.0
  %74 = vmatprep.subr.mxu0 0.0
  %75 = vmatpush1.msra.mxu0 0.0
  %76 = vmatprep.subr.mxu0 0.0
  %77 = vmatpush1.msra.mxu0 0.0
  %78 = vmatprep.subr.mxu0 0.0
  %79 = vmatpush1.msra.mxu0 0.0
  %80 = vmatprep.subr.mxu0 0.0
  %81 = vmatpush1.msra.mxu0 0.0
  %82 = vmatprep.subr.mxu0 0.0
  %83 = vmatpush1.msra.mxu0 0.0
  %84 = vmatprep.subr.mxu0 0.0
  %85 = vmatpush1.msra.mxu0 0.0
  %86 = vmatprep.subr.mxu0 0.0
  %87 = vmatpush1.msra.mxu0 0.0
  %88 = vmatprep.subr.mxu0 0.0
  %89 = vmatpush1.msra.mxu0 0.0
  %90 = vmatprep.mubr.f32.mxu0 0.0
  %91 = vmatmul.mubr.f32.gmra.mrb[0].mxu0 %v24
  %v92 = vpop.f32.mrb[0].mxu0
  %v93 = vadd.f32 0.0, %v92
  %v94 = vpop.f32.mrb[0].mxu0
  %95 = vdwg.mxu0
  %97 = vset.pattern.permute.xlu0 0
  %98 = vperm.xlu0 %97, %v18
  %v99 = vpop.permute.xlu0 %98
  %v101 = vmul.f32 %v93, %v99
  %103 = vset.pattern.permute.xlu0 0
  %104 = vperm.xlu0 %103, %v19
  %v105 = vpop.permute.xlu0 %104
  %v107 = vadd.f32 %v101, %v105
  %vm108 = vcmask 523264
  %109 = vst.msk [vmem:[%s4] sm:$0xff] %vm108, %v107
  %s110 = scalar_lea.vmem %s0, 8
  %v111 = vld [vmem:[%s110] sm:$0xff]
  %v112 = vmax.f32 %v111, 0.0
  %113 = vmatprep.subr.mxu0 0.0
  %114 = vmatpush1.msra.mxu0 %v112
  %115 = vmatprep.subr.mxu0 0.0
  %116 = vmatpush1.msra.mxu0 0.0
  %117 = vmatprep.subr.mxu0 0.0
  %118 = vmatpush1.msra.mxu0 0.0
  %119 = vmatprep.subr.mxu0 0.0
  %120 = vmatpush1.msra.mxu0 0.0
  %121 = vmatprep.subr.mxu0 0.0
  %122 = vmatpush1.msra.mxu0 0.0
  %123 = vmatprep.subr.mxu0 0.0
  %124 = vmatpush1.msra.mxu0 0.0
  %125 = vmatprep.subr.mxu0 0.0
  %126 = vmatpush1.msra.mxu0 0.0
  %127 = vmatprep.subr.mxu0 0.0
  %128 = vmatpush1.msra.mxu0 0.0
  %129 = vmatprep.subr.mxu0 0.0
  %130 = vmatpush1.msra.mxu0 0.0
  %131 = vmatprep.subr.mxu0 0.0
  %132 = vmatpush1.msra.mxu0 0.0
  %133 = vmatprep.subr.mxu0 0.0
  %134 = vmatpush1.msra.mxu0 0.0
  %135 = vmatprep.subr.mxu0 0.0
  %136 = vmatpush1.msra.mxu0 0.0
  %137 = vmatprep.subr.mxu0 0.0
  %138 = vmatpush1.msra.mxu0 0.0
  %139 = vmatprep.subr.mxu0 0.0
  %140 = vmatpush1.msra.mxu0 0.0
  %141 = vmatprep.subr.mxu0 0.0
  %142 = vmatpush1.msra.mxu0 0.0
  %143 = vmatprep.subr.mxu0 0.0
  %144 = vmatpush1.msra.mxu0 0.0
  %145 = vmatprep.subr.mxu0 0.0
  %146 = vmatpush1.msra.mxu0 0.0
  %147 = vmatprep.subr.mxu0 0.0
  %148 = vmatpush1.msra.mxu0 0.0
  %149 = vmatprep.subr.mxu0 0.0
  %150 = vmatpush1.msra.mxu0 0.0
  %151 = vmatprep.subr.mxu0 0.0
  %152 = vmatpush1.msra.mxu0 0.0
  %153 = vmatprep.subr.mxu0 0.0
  %154 = vmatpush1.msra.mxu0 0.0
  %155 = vmatprep.subr.mxu0 0.0
  %156 = vmatpush1.msra.mxu0 0.0
  %157 = vmatprep.subr.mxu0 0.0
  %158 = vmatpush1.msra.mxu0 0.0
  %159 = vmatprep.subr.mxu0 0.0
  %160 = vmatpush1.msra.mxu0 0.0
  %161 = vmatprep.subr.mxu0 0.0
  %162 = vmatpush1.msra.mxu0 0.0
  %163 = vmatprep.subr.mxu0 0.0
  %164 = vmatpush1.msra.mxu0 0.0
  %165 = vmatprep.subr.mxu0 0.0
  %166 = vmatpush1.msra.mxu0 0.0
  %167 = vmatprep.subr.mxu0 0.0
  %168 = vmatpush1.msra.mxu0 0.0
  %169 = vmatprep.subr.mxu0 0.0
  %170 = vmatpush1.msra.mxu0 0.0
  %171 = vmatprep.subr.mxu0 0.0
  %172 = vmatpush1.msra.mxu0 0.0
  %173 = vmatprep.subr.mxu0 0.0
  %174 = vmatpush1.msra.mxu0 0.0
  %175 = vmatprep.subr.mxu0 0.0
  %176 = vmatpush1.msra.mxu0 0.0
  %177 = vmatprep.mubr.f32.mxu0 0.0
  %178 = vmatmul.mubr.f32.gmra.mrb[0].mxu0 %v24
  %v179 = vpop.f32.mrb[0].mxu0
  %v180 = vadd.f32 0.0, %v179
  %v181 = vpop.f32.mrb[0].mxu0
  %182 = vdwg.mxu0
  %v183 = vmul.f32 %v180, %v99
  %v184 = vadd.f32 %v183, %v105
  %s185 = scalar_lea.vmem %s4, 8
  %186 = vst.msk [vmem:[%s185] sm:$0xff] %vm108, %v184
  // Predicated region
  $region18: #{factorized_reduce.3} parent=0 // pred_check
    _
  $region19: #{factorized_reduce.3} parent=0 // pred_check_branch
    %188 = sbr.rel (0) target = $region21
  $region20: #{factorized_reduce.3} parent=0 // pred_region
    _
  $region21: #{factorized_reduce.3} parent=0 // pred_fallthru
    _
  // Predicated region
  $region22: #{factorized_reduce.3} parent=0 // pred_check
    _
  $region23: #{factorized_reduce.3} parent=0 // pred_check_branch
    %190 = sbr.rel (0) target = $region25
  $region24: #{factorized_reduce.3} parent=0 // pred_region
    _
  $region25: #{factorized_reduce.3} parent=0 // pred_fallthru
    _

</llo_original>
